<compile_context>
chip_gen: v7x
topology: tpu7x:2x2x1
jax: 0.10.0
libtpu: 0.0.40
codegen_flags: <defaults>
</compile_context>

<pallas_src>
import math

import jax
import jax.numpy as jnp
from jax.experimental import pallas as pl
from jax.experimental.pallas import tpu as pltpu


# ----------------------------- Kernel ----------------------------------------
def _pooler_kernel(x_ref, w_ref, b_ref, o_ref, acc_ref):
    """Grid: (batch tile i, sequence chunk k). x:(bm,ts,H) w:(H,H) b:(1,H)."""
    k = pl.program_id(1)

    @pl.when(k == 0)
    def _init():
        acc_ref[...] = jnp.zeros_like(acc_ref)

    # Partial sequence sum with an f32 accumulator; the (bm, ts, H) tile is
    # reduced directly in its input dtype (no materialized f32 copy).
    acc_ref[...] += jnp.sum(x_ref[...], axis=1, dtype=jnp.float32)

    @pl.when(k == pl.num_programs(1) - 1)
    def _finalize():
        # Weight is pre-scaled by 1/S on the host, so acc holds raw sums.
        y = jnp.dot(acc_ref[...].astype(w_ref.dtype), w_ref[...],
                    preferred_element_type=jnp.float32)        # (bm, H) on MXU
        o_ref[...] = jnp.tanh(y + b_ref[...]).astype(o_ref.dtype)


# ----------------------------- Wrapper ----------------------------------------
def bert_pooler(hidden_states, w_scaled_t, bias2d, *, bm=None, ts=None):
    """hidden_states: (B, S, H); w_scaled_t: (H, H) = (W.T / S) in bf16;
    bias2d: (1, H) f32.  Returns (B, H) in hidden_states.dtype."""
    B, S, H = hidden_states.shape
    itemsize = hidden_states.dtype.itemsize

    # --- batch tile: fill the MXU M dimension where the batch allows ---------
    if bm is None:
        bm = min(B, 256)
        while B % bm:                     # largest divisor of B (<= 256)
            bm -= 1
        if B // bm < 2 and bm > 8 and bm % 2 == 0:
            bm //= 2                      # keep >=2 parallel tiles for v7x's 2 TCs
    # --- sequence chunk: cap the activation block at ~2 MiB per buffer -------
    if ts is None:
        ts = S
        budget = 2 << 20
        while bm * ts * H * itemsize > budget and ts % 16 == 0:
            ts //= 2                      # stays a multiple of 8 (sublane rule)
    assert B % bm == 0 and S % ts == 0, "demo tiling requires exact division"

    grid = (B // bm, S // ts)

    # VMEM sizing (double-buffered inputs/outputs + f32 accumulator scratch).
    x_blk = bm * ts * H * itemsize
    w_blk = H * H * w_scaled_t.dtype.itemsize
    b_blk = H * bias2d.dtype.itemsize
    o_blk = bm * H * itemsize
    need = 2 * (x_blk + w_blk + b_blk + o_blk) + bm * H * 4
    vmem_limit = int(min(max(2 * need, 32 << 20), 64 << 20))

    return pl.pallas_call(
        _pooler_kernel,
        out_shape=jax.ShapeDtypeStruct((B, H), hidden_states.dtype),
        grid_spec=pltpu.PrefetchScalarGridSpec(
            num_scalar_prefetch=0,
            grid=grid,
            in_specs=[
                # activations: one (bm, ts, H) chunk per grid step.
                # (pipeline_mode=pl.Buffered(3) is a candidate when S//ts is
                #  large and VMEM headroom exists — sweep before enabling.)
                pl.BlockSpec((bm, ts, H), lambda i, k: (i, k, 0)),
                # bf16 weight (in, out): constant block index -> DMA'd once.
                pl.BlockSpec((H, H), lambda i, k: (0, 0)),
                # bias row, constant block index.
                pl.BlockSpec((1, H), lambda i, k: (0, 0)),
            ],
            out_specs=pl.BlockSpec((bm, H), lambda i, k: (i, 0)),
            scratch_shapes=[pltpu.VMEM((bm, H), jnp.float32)],   # raw seq sums
        ),
        compiler_params=pltpu.CompilerParams(
            dimension_semantics=("parallel", "arbitrary"),
            vmem_limit_bytes=vmem_limit),
    )(hidden_states, w_scaled_t, bias2d)


# ----------------------------- Module -----------------------------------------
class BertPoolerPallas:
    def __init__(self, hidden_size, key):
        self.hidden_size = hidden_size
        # nn.Linear default init: uniform(-1/sqrt(in), 1/sqrt(in)); PyTorch
        # stores weight as (out, in).
        bound = 1.0 / math.sqrt(hidden_size)
        kw, kb = jax.random.split(key)
        self.weight = jax.random.uniform(kw, (hidden_size, hidden_size),
                                         jnp.float32, -bound, bound)
        self.bias = jax.random.uniform(kb, (hidden_size,),
                                       jnp.float32, -bound, bound)
        self.weight_t = self.weight.T                 # (in, out) for the MXU

    def kernel_weights(self, seq_len):
        # Fold the 1/S of the mean into the weight (host side, once) and cast
        # to bf16 to halve weight DMA / hit the native bf16 MXU path.
        w_scaled = (self.weight_t * (1.0 / seq_len)).astype(jnp.bfloat16)
        return w_scaled, self.bias.reshape(1, self.hidden_size)

    def __call__(self, hidden_states):
        S = hidden_states.shape[1]
        w_scaled, b2d = self.kernel_weights(S)
        return bert_pooler(hidden_states, w_scaled, b2d)


# ----------------------------- References --------------------------------------
def reference_same_math(hidden_states, w_scaled_bf16, bias2d):
    """Bit-faithful reference of the kernel's math (same bf16-quantized weight)."""
    s = jnp.sum(hidden_states.astype(jnp.float32), axis=1)
    y = jnp.dot(s.astype(jnp.bfloat16), w_scaled_bf16,
                preferred_element_type=jnp.float32)
    return jnp.tanh(y + bias2d)


def reference_f32(hidden_states, mod):
    """Original PyTorch-semantics reference in full f32."""
    mean = jnp.mean(hidden_states.astype(jnp.float32), axis=1)
    return jnp.tanh(mean @ mod.weight.T + mod.bias)


# ----------------------------- Main --------------------------------------------
if __name__ == "__main__":
    B, S, H = 2, 8, 32
    key = jax.random.PRNGKey(0)
    k_x, k_p = jax.random.split(key)

    hidden_states = jax.random.normal(k_x, (B, S, H), jnp.float32)
    mod = BertPoolerPallas(hidden_size=H, key=k_p)

    out = jax.block_until_ready(mod(hidden_states))
    assert out.shape == (B, H)

    # 1) exact-math check against a reference using the same bf16 weights.
    w_scaled, b2d = mod.kernel_weights(S)
    ref_bits = reference_same_math(hidden_states, w_scaled, b2d)
    err_bits = float(jnp.max(jnp.abs(out - ref_bits)))
    assert jnp.allclose(out, ref_bits, atol=1e-4, rtol=1e-4), (
        f"kernel vs same-math reference, max abs err = {err_bits}")

    # 2) semantic check against the full-f32 PyTorch math (bf16-level tolerance).
    ref_full = reference_f32(hidden_states, mod)
    err_full = float(jnp.max(jnp.abs(out.astype(jnp.float32) - ref_full)))
    assert jnp.allclose(out.astype(jnp.float32), ref_full, atol=3e-2, rtol=3e-2), (
        f"kernel vs f32 reference, max abs err = {err_full}")

    print("KERNEL_OK")
</pallas_src>

<mosaic_0001>
module attributes {stable_mosaic.version = 11 : i64} {
  func.func @_pooler_kernel(%arg0: i32, %arg1: i32, %arg2: memref<2x8x32xf32, #tpu.memory_space<vmem>>, %arg3: memref<32x32xbf16, #tpu.memory_space<vmem>>, %arg4: memref<1x32xf32, #tpu.memory_space<vmem>>, %arg5: memref<2x32xf32, #tpu.memory_space<vmem>>, %arg6: memref<2x32xf32, #tpu.memory_space<vmem>>) attributes {dimension_semantics = [#tpu.dimension_semantics<parallel>, #tpu.dimension_semantics<arbitrary>], iteration_bounds = array<i64: 1, 1>, scalar_prefetch = 0 : i64, scratch_operands = 1 : i64, tpu.core_type = #tpu.core_type<tc>, window_params = [{transform_indices = @transform_0, window_bounds = array<i64: 2, 8, 32>}, {pipeline_mode = #tpu.pipeline_mode<synchronous>, transform_indices = @transform_1, window_bounds = array<i64: 32, 32>}, {pipeline_mode = #tpu.pipeline_mode<synchronous>, transform_indices = @transform_2, window_bounds = array<i64: 1, 32>}, {transform_indices = @transform_3, window_bounds = array<i64: 2, 32>}]} {
    %c0_i32 = arith.constant 0 : i32
    %0 = arith.cmpi eq, %arg1, %c0_i32 : i32
    %1 = arith.extui %0 : i1 to i32
    %c0_i32_0 = arith.constant 0 : i32
    %2 = arith.cmpi ne, %1, %c0_i32_0 : i32
    scf.if %2 {
      %cst_9 = arith.constant 0.000000e+00 : f32
      %11 = vector.broadcast %cst_9 : f32 to vector<2x32xf32>
      %c0_10 = arith.constant 0 : index
      %c0_11 = arith.constant 0 : index
      %12 = vector.load %arg6[%c0_10, %c0_11] : memref<2x32xf32, #tpu.memory_space<vmem>>, vector<2x32xf32>
      tpu.vector_store %arg6[%c0_10, %c0_11], %11 {strides = array<i32>} : memref<2x32xf32, #tpu.memory_space<vmem>>, vector<2x32xf32>,
    } else {
    }
    %c0 = arith.constant 0 : index
    %c0_1 = arith.constant 0 : index
    %3 = vector.load %arg6[%c0, %c0_1] : memref<2x32xf32, #tpu.memory_space<vmem>>, vector<2x32xf32>
    %c0_2 = arith.constant 0 : index
    %c0_3 = arith.constant 0 : index
    %c0_4 = arith.constant 0 : index
    %4 = vector.load %arg2[%c0_2, %c0_3, %c0_4] : memref<2x8x32xf32, #tpu.memory_space<vmem>>, vector<2x8x32xf32>
    %cst = arith.constant dense<0.000000e+00> : vector<2x32xf32>
    %5 = vector.multi_reduction <add>, %4, %cst [1] : vector<2x8x32xf32> to vector<2x32xf32>
    %6 = arith.addf %3, %5 : vector<2x32xf32>
    %c0_5 = arith.constant 0 : index
    %c0_6 = arith.constant 0 : index
    %7 = vector.load %arg6[%c0_5, %c0_6] : memref<2x32xf32, #tpu.memory_space<vmem>>, vector<2x32xf32>
    tpu.vector_store %arg6[%c0_5, %c0_6], %6 {strides = array<i32>} : memref<2x32xf32, #tpu.memory_space<vmem>>, vector<2x32xf32>,
    %c0_i32_7 = arith.constant 0 : i32
    %8 = arith.cmpi eq, %arg1, %c0_i32_7 : i32
    %9 = arith.extui %8 : i1 to i32
    %c0_i32_8 = arith.constant 0 : i32
    %10 = arith.cmpi ne, %9, %c0_i32_8 : i32
    scf.if %10 {
      %c0_9 = arith.constant 0 : index
      %c0_10 = arith.constant 0 : index
      %11 = vector.load %arg6[%c0_9, %c0_10] : memref<2x32xf32, #tpu.memory_space<vmem>>, vector<2x32xf32>
      %12 = arith.truncf %11 : vector<2x32xf32> to vector<2x32xbf16>
      %c0_11 = arith.constant 0 : index
      %c0_12 = arith.constant 0 : index
      %13 = vector.load %arg3[%c0_11, %c0_12] : memref<32x32xbf16, #tpu.memory_space<vmem>>, vector<32x32xbf16>
      %cst_13 = arith.constant dense<0.000000e+00> : vector<2x32xf32>
      %14 = tpu.matmul %12, %13, %cst_13 {dimension_numbers = #tpu.dot_dimension_numbers<[1], [0], [0], [1], [0, 0, 1, 1], [], []>} : vector<2x32xbf16>, vector<32x32xbf16>, vector<2x32xf32> -> vector<2x32xf32>
      %c0_14 = arith.constant 0 : index
      %c0_15 = arith.constant 0 : index
      %15 = vector.load %arg4[%c0_14, %c0_15] : memref<1x32xf32, #tpu.memory_space<vmem>>, vector<1x32xf32>
      %16 = vector.broadcast %15 : vector<1x32xf32> to vector<2x32xf32>
      %17 = arith.addf %14, %16 : vector<2x32xf32>
      %18 = math.tanh %17 : vector<2x32xf32>
      %c0_16 = arith.constant 0 : index
      %c0_17 = arith.constant 0 : index
      %19 = vector.load %arg5[%c0_16, %c0_17] : memref<2x32xf32, #tpu.memory_space<vmem>>, vector<2x32xf32>
      tpu.vector_store %arg5[%c0_16, %c0_17], %18 {strides = array<i32>} : memref<2x32xf32, #tpu.memory_space<vmem>>, vector<2x32xf32>,
    } else {
    }
    return
  }
  func.func @transform_0(%arg0: i32, %arg1: i32) -> (i32, i32, i32) {
    %c0_i32 = arith.constant 0 : i32
    %c0_i32_0 = arith.constant 0 : i32
    return %arg0, %arg1, %c0_i32 : i32, i32, i32
  }
  func.func @transform_1(%arg0: i32, %arg1: i32) -> (i32, i32) {
    %c0_i32 = arith.constant 0 : i32
    %c0_i32_0 = arith.constant 0 : i32
    %c0_i32_1 = arith.constant 0 : i32
    return %c0_i32, %c0_i32_0 : i32, i32
  }
  func.func @transform_2(%arg0: i32, %arg1: i32) -> (i32, i32) {
    %c0_i32 = arith.constant 0 : i32
    %c0_i32_0 = arith.constant 0 : i32
    %c0_i32_1 = arith.constant 0 : i32
    return %c0_i32, %c0_i32_0 : i32, i32
  }
  func.func @transform_3(%arg0: i32, %arg1: i32) -> (i32, i32) {
    %c0_i32 = arith.constant 0 : i32
    %c0_i32_0 = arith.constant 0 : i32
    return %arg0, %c0_i32 : i32, i32
  }
}

</mosaic_0001>

<llo_original>
// kernel: tpu_custom_call.1
$region0: #{tpu_custom_call.1}
  #allocation0 [shape = 'u32[]', space=smem, size = 0x4, offset = 0x4, fixed_abs, tag = 'smem constant byte address 0x4 - core index']
  #allocation1 [shape = 'u32[144,128]{1,0:T(1,128)}', space=vmem, size = 0x12000, scoped, tag = 'internal scratch']
  #allocation2 [shape = 'f32[2,32]{1,0:T(2,128)}', space=vmem, size = 0x400, scoped, tag = 'scratch operand']
  %s0 = inlined_call_operand.hbm [shape: f32[2,8,32], index: 0, kind: input, shape index: {}]
  %s1 = inlined_call_operand.hbm [shape: bf16[32,32], index: 1, kind: input, shape index: {}]
  %s2 = inlined_call_operand.vmem [shape: f32[1,32], index: 2, kind: input, shape index: {}]
  %s3 = inlined_call_operand.hbm [shape: f32[2,32], index: 3, kind: output, shape index: {}]
  %s4 = sld [smem:[#allocation0]]
  $region38: #{tpu_custom_call.1} parent=0
    _
  %s6 = ssub.s32 1, %s4
  %s7 = scalar_select 0, %s6, %s4
  $region1: #{tpu_custom_call.1} parent=0
    #allocation3 [shape = 'u8[8192]{0}', space=vmem, size = 0x2000, scoped, tag = 'input window, operand 0, single buffered']
    #allocation4 [shape = 's32[1]{0}', space=sflag, size = 0x4, scoped, tag = 'scoped memory for tpu_custom_call.1']
    #allocation5 [shape = 's32[1]{0}', space=sflag, size = 0x4, scoped, tag = 'scoped memory for tpu_custom_call.1']
    #allocation6 [shape = 'u8[8192]{0}', space=vmem, size = 0x2000, scoped, tag = 'input window, operand 1, single buffered']
    #allocation7 [shape = 's32[1]{0}', space=sflag, size = 0x4, scoped, tag = 'scoped memory for tpu_custom_call.1']
    #allocation8 [shape = 'u8[1024]{0}', space=vmem, size = 0x400, scoped, tag = 'output window, operand 0, single buffered']
    %8 = vsyncpa [#allocation4], 0
    %9 = vsyncpa [#allocation7], 0
    %10 = vsyncpa [#allocation5], 0
    // Predicated region
    $region2: #{tpu_custom_call.1} parent=1 // pred_check
      _
    $region3: #{tpu_custom_call.1} parent=1 // pred_check_branch
      %12 = sbr.rel (0) target = $region5
    $region4: #{tpu_custom_call.1} parent=1 // pred_region
      %s14 = ssub.s32 256, 256
      %15 = vsyncadd [#allocation4], %s14
      %s16 = sshll.u32 [#allocation3], 4
      %s17 = int_to_ptr.vmem [resolvable:$true] %s16
      %22 = dma.hbm_to_vmem [thread:$0]  %s0, 256, %s17, [#allocation4], 128, 128, 8
    $region5: #{tpu_custom_call.1} parent=1 // pred_fallthru
      _
    // Predicated region
    $region6: #{tpu_custom_call.1} parent=1 // pred_check
      _
    $region7: #{tpu_custom_call.1} parent=1 // pred_check_branch
      %24 = sbr.rel (0) target = $region9
    $region8: #{tpu_custom_call.1} parent=1 // pred_region
      %s26 = ssub.s32 256, 256
      %27 = vsyncadd [#allocation7], %s26
      %s28 = sshll.u32 [#allocation6], 4
      %s29 = int_to_ptr.vmem [resolvable:$true] %s28
      %34 = dma.hbm_to_vmem [thread:$0]  %s1, 256, %s29, [#allocation7], 64, 64, 4
    $region9: #{tpu_custom_call.1} parent=1 // pred_fallthru
      _
    // Predicated region
    $region10: #{tpu_custom_call.1} parent=1 // pred_check
      _
    $region11: #{tpu_custom_call.1} parent=1 // pred_check_branch
      %36 = sbr.rel (0) target = $region13
    $region12: #{tpu_custom_call.1} parent=1 // pred_region
      _
    $region13: #{tpu_custom_call.1} parent=1 // pred_fallthru
      _
    // Predicated region
    $region14: #{tpu_custom_call.1} parent=1 // pred_check
      _
    $region15: #{tpu_custom_call.1} parent=1 // pred_check_branch
      %38 = sbr.rel (0) target = $region17
    $region16: #{tpu_custom_call.1} parent=1 // pred_region
      %39 = dma.done [#allocation4], 256
    $region17: #{tpu_custom_call.1} parent=1 // pred_fallthru
      _
    // Predicated region
    $region18: #{tpu_custom_call.1} parent=1 // pred_check
      _
    $region19: #{tpu_custom_call.1} parent=1 // pred_check_branch
      %41 = sbr.rel (0) target = $region21
    $region20: #{tpu_custom_call.1} parent=1 // pred_region
      %42 = dma.done [#allocation7], 256
    $region21: #{tpu_custom_call.1} parent=1 // pred_fallthru
      _
    %p44 = scmp.eq.s32.totalorder 0, 0
    // Predicated region
    $region22: #{tpu_custom_call.1} parent=1 // pred_check
      %p45 = pneg %p44
    $region23: #{tpu_custom_call.1} parent=1 // pred_check_branch
      %47 = sbr.rel (%p45) target = $region25
    $region24: #{tpu_custom_call.1} parent=1 // pred_region
      %vm48 = vcmask 254976
      %49 = vst.msk [vmem:[#allocation2] sm:$0x3] %vm48, 0.0
    $region25: #{tpu_custom_call.1} parent=1 // pred_fallthru
      _
    %v50 = vld [vmem:[#allocation2] sm:$0x3]
    %v51 = vld [vmem:[#allocation3] sm:$0xff]
    %v52 = vld [vmem:[#allocation3 + $0x8] sm:$0xff]
    %vm53 = vcmask 261120
    %v54 = vsel %vm53, %v51, 0.0
    %v55 = vrot.slane %v54, 4
    %v56 = vadd.f32 %v54, %v55
    %v57 = vrot.slane %v56, 2
    %v58 = vadd.f32 %v56, %v57
    %v59 = vrot.slane %v58, 1
    %v60 = vadd.f32 %v58, %v59
    %v61 = vsel %vm53, %v52, 0.0
    %v62 = vrot.slane %v61, 4
    %v63 = vadd.f32 %v61, %v62
    %v64 = vrot.slane %v63, 2
    %v65 = vadd.f32 %v63, %v64
    %v66 = vrot.slane %v65, 1
    %v67 = vadd.f32 %v65, %v66
    %vm70 = vcmask 1041409
    %v71 = vsel %vm70, %v67, %v60
    %v73 = vadd.f32 %v50, %v71
    %vm74 = vcmask 254976
    %75 = vst.msk [vmem:[#allocation2] sm:$0x3] %vm74, %v73
    // Predicated region
    $region26: #{tpu_custom_call.1} parent=1 // pred_check
      %p76 = pneg %p44
    $region27: #{tpu_custom_call.1} parent=1 // pred_check_branch
      %78 = sbr.rel (%p76) target = $region29
    $region28: #{tpu_custom_call.1} parent=1 // pred_region
      %v79 = vld [vmem:[#allocation2] sm:$0x3]
      %v80 = vpack.c.bf16 %v79, %v79
      %v81 = vld [vmem:[#allocation6] sm:$0xf]
      %v82 = vld [vmem:[#allocation6 + $0x4] sm:$0xf]
      %v83 = vld [vmem:[#allocation6 + $0x8] sm:$0xf]
      %v84 = vld [vmem:[#allocation6 + $0xc] sm:$0xf]
      %v85 = vld [vmem:[%s2] sm:$0x1]
      %v87 = vlaneseq
      %v88 = vshrl.u32 %v87, 7
      %v89 = vsub.s32 0, %v88
      %v90 = vrot.slane %v85, %v89
      %v96 = vunpack.c.l.b16 %v81
      %v97 = vunpack.c.l.b16 %v82
      %v98 = vunpack.c.l.b16 %v83
      %v99 = vunpack.c.l.b16 %v84
      %v100 = vpack.c.b16 %v97, %v96
      %v101 = vpack.c.b16 %v99, %v98
      %v105 = vsel %vm53, %v80, 0
      %107 = vmatprep.subr.bf16.mxu0 0
      %108 = vmatpush1.bf16.msra.mxu0 %v100
      %109 = vmatprep.subr.bf16.mxu0 0
      %110 = vmatpush1.bf16.msra.mxu0 %v101
      %111 = vmatprep.subr.bf16.mxu0 0
      %112 = vmatpush1.bf16.msra.mxu0 0
      %113 = vmatprep.subr.bf16.mxu0 0
      %114 = vmatpush1.bf16.msra.mxu0 0
      %115 = vmatprep.subr.bf16.mxu0 0
      %116 = vmatpush1.bf16.msra.mxu0 0
      %117 = vmatprep.subr.bf16.mxu0 0
      %118 = vmatpush1.bf16.msra.mxu0 0
      %119 = vmatprep.subr.bf16.mxu0 0
      %120 = vmatpush1.bf16.msra.mxu0 0
      %121 = vmatprep.subr.bf16.mxu0 0
      %122 = vmatpush1.bf16.msra.mxu0 0
      %123 = vmatprep.subr.bf16.mxu0 0
      %124 = vmatpush1.bf16.msra.mxu0 0
      %125 = vmatprep.subr.bf16.mxu0 0
      %126 = vmatpush1.bf16.msra.mxu0 0
      %127 = vmatprep.subr.bf16.mxu0 0
      %128 = vmatpush1.bf16.msra.mxu0 0
      %129 = vmatprep.subr.bf16.mxu0 0
      %130 = vmatpush1.bf16.msra.mxu0 0
      %131 = vmatprep.subr.bf16.mxu0 0
      %132 = vmatpush1.bf16.msra.mxu0 0
      %133 = vmatprep.subr.bf16.mxu0 0
      %134 = vmatpush1.bf16.msra.mxu0 0
      %135 = vmatprep.subr.bf16.mxu0 0
      %136 = vmatpush1.bf16.msra.mxu0 0
      %137 = vmatprep.subr.bf16.mxu0 0
      %138 = vmatpush1.bf16.msra.mxu0 0
      %139 = vmatprep.mubr.bf16.mxu0 0
      %140 = vmatmul.mubr.bf16.gmra.mrb[0].mxu0 %v105
      %v141 = vpop.f32.mrb[0].mxu0
      %v142 = vadd.f32 %v90, %v141
      %v143 = vpop.f32.mrb[0].mxu0
      %v144 = vpop.f32.mrb[0].mxu0
      %v145 = vpop.f32.mrb[0].mxu0
      %146 = vdwg.mxu0
      %v147 = vtanh.pop %v142
      %148 = vst.msk [vmem:[#allocation8] sm:$0x3] %vm74, %v147
    $region29: #{tpu_custom_call.1} parent=1 // pred_fallthru
      _
    // Predicated region
    $region30: #{tpu_custom_call.1} parent=1 // pred_check
      _
    $region31: #{tpu_custom_call.1} parent=1 // pred_check_branch
      %150 = sbr.rel (0) target = $region33
    $region32: #{tpu_custom_call.1} parent=1 // pred_region
      %s152 = ssub.s32 32, 32
      %153 = vsyncadd [#allocation5], %s152
      %s155 = sshll.u32 [#allocation8], 4
      %s156 = int_to_ptr.vmem [resolvable:$true] %s155
      %158 = dma.vmem_to_hbm [thread:$0]  %s156, 32, %s3, [#allocation5]
    $region33: #{tpu_custom_call.1} parent=1 // pred_fallthru
      _
    // Predicated region
    $region34: #{tpu_custom_call.1} parent=1 // pred_check
      _
    $region35: #{tpu_custom_call.1} parent=1 // pred_check_branch
      %160 = sbr.rel (0) target = $region37
    $region36: #{tpu_custom_call.1} parent=1 // pred_region
      %161 = dma.done [#allocation5], 32
    $region37: #{tpu_custom_call.1} parent=1 // pred_fallthru
      _
    %162 = vsyncpa [#allocation4], 1
    %163 = vsyncpa [#allocation7], 1
    %164 = vsyncpa [#allocation5], 1

</llo_original>
